<compile_context>
chip_gen: v5e
topology: v5e:2x2
jax: 0.10.0
libtpu: 0.0.40
codegen_flags: <defaults>
</compile_context>

<pallas_src>
import functools

import jax
import jax.numpy as jnp
from jax import lax
from jax.experimental import pallas as pl
from jax.experimental.pallas import tpu as pltpu


def _norm2d_kernel(x_ref, w_ref, b_ref, o_ref, *, eps, inv_c):
    """LayerNorm across the channel (sublane) axis of a (1, C, T) tile.

    x_ref : VMEM (1, C, T) input tile (input dtype)
    w_ref : VMEM (1, C, 1) scale, f32
    b_ref : VMEM (1, C, 1) shift, f32
    o_ref : VMEM (1, C, T) output tile (input dtype)
    """
    x = x_ref[...].astype(jnp.float32)                        # (1, C, T)
    s1 = jnp.sum(x, axis=1, keepdims=True)                    # (1, 1, T)  XLU sublane reduce
    s2 = jnp.sum(x * x, axis=1, keepdims=True)                 # (1, 1, T)
    mean = s1 * inv_c
    var = s2 * inv_c - mean * mean                             # biased variance (matches nn.LayerNorm)
    inv = lax.rsqrt(var + eps)                                 # EUP rsqrt (free slot)
    scale = w_ref[...] * inv                                   # (1, C, T)
    shift = b_ref[...] - mean * scale                          # (1, C, T)
    o_ref[...] = (x * scale + shift).astype(o_ref.dtype)       # single FMA-style pass


def _tpu_vmem_bytes():
    """Physical VMEM of the current TPU generation (safe floor if unknown)."""
    try:
        info = pltpu.get_tpu_info()
        cap = getattr(info, "vmem_capacity_bytes", None)
        if cap:
            return int(cap)
    except Exception:
        pass
    return 64 << 20   # v7x per-TensorCore physical VMEM; conservative for all gens


def _largest_tile(hw, cap_elems):
    """Largest 128-multiple that divides hw (hw % 128 == 0) and is <= max(cap, 128)."""
    t = max((min(cap_elems, hw) // 128) * 128, 128)
    while hw % t != 0:
        t -= 128
    return t


def _choose_tile_hw(hw_pad, c, itemsize, tile_budget_bytes, batch):
    """Spatial tile width sized from the real per-tile VMEM footprint.

    Per element of one x tile:
      2x double-buffered input + 2x double-buffered output (input dtype)
      + ~2 full-tile f32 temporaries (the f32 cast and the x*scale product) that
        Mosaic materializes around the cross-sublane reduction.
    """
    per_elem = 4 * itemsize + 2 * 4
    cap_elems = max(tile_budget_bytes // (c * per_elem), 128)
    t = _largest_tile(hw_pad, cap_elems)
    # Guarantee >= 2 'parallel' grid steps so both v7x TensorCores get work
    # (no-op on 1-TC v5e/v6e, and when hw_pad cannot be split further).
    if batch * (hw_pad // t) < 2:
        t_half = _largest_tile(hw_pad, hw_pad // 2)
        if t_half < hw_pad:
            t = t_half
    return t


def norm2d(x, weight, bias, *, eps=1e-6, tile_hw=None):
    """Pallas Norm2d forward. x: (B, C, H, W); weight/bias: (C,)."""
    B, C, H, W = x.shape
    HW = H * W
    HW_pad = pl.cdiv(HW, 128) * 128          # lane-dense, 128-multiple spatial axis

    x2 = x.reshape(B, C, HW)                 # pure metadata reshape, no transpose
    if HW_pad != HW:
        # Pad spatial positions instead of using a full-extent (C, H*W) block:
        # padded columns normalize zeros independently and are sliced off below.
        x2 = jnp.pad(x2, ((0, 0), (0, 0), (0, HW_pad - HW)))

    w = weight.astype(jnp.float32).reshape(1, C, 1)
    b = bias.astype(jnp.float32).reshape(1, C, 1)

    phys = _tpu_vmem_bytes()
    # Scoped-VMEM limit for this kernel: most of physical, capped, never below 16 MiB.
    vmem_limit = max(min(phys - (2 << 20), 100 << 20), 16 << 20)
    if tile_hw is None:
        tile_hw = _choose_tile_hw(HW_pad, C, x.dtype.itemsize, vmem_limit // 2, B)
    assert HW_pad % tile_hw == 0 and tile_hw % 128 == 0

    kernel = functools.partial(_norm2d_kernel, eps=float(eps), inv_c=1.0 / C)

    out = pl.pallas_call(
        kernel,
        out_shape=jax.ShapeDtypeStruct((B, C, HW_pad), x.dtype),
        grid_spec=pltpu.PrefetchScalarGridSpec(
            num_scalar_prefetch=0,
            grid=(B, HW_pad // tile_hw),
            in_specs=[
                pl.BlockSpec((1, C, tile_hw), lambda bb, t: (bb, 0, t)),
                pl.BlockSpec((1, C, 1), lambda bb, t: (0, 0, 0)),
                pl.BlockSpec((1, C, 1), lambda bb, t: (0, 0, 0)),
            ],
            out_specs=pl.BlockSpec((1, C, tile_hw), lambda bb, t: (bb, 0, t)),
        ),
        compiler_params=pltpu.CompilerParams(
            dimension_semantics=("parallel", "parallel"),
            vmem_limit_bytes=int(vmem_limit),
        ),
    )(x2, w, b)

    if HW_pad != HW:
        out = out[:, :, :HW]
    return out.reshape(B, C, H, W)


class Norm2d:
    """JAX/Pallas port of the PyTorch Norm2d module (LayerNorm over channels)."""

    def __init__(self, embed_dim, eps=1e-6, dtype=jnp.float32):
        self.embed_dim = embed_dim
        self.eps = eps
        self.weight = jnp.ones((embed_dim,), dtype=dtype)
        self.bias = jnp.zeros((embed_dim,), dtype=dtype)

    def __call__(self, x):
        return norm2d(x, self.weight, self.bias, eps=self.eps)


if __name__ == "__main__":
    key = jax.random.PRNGKey(0)
    kx, kw, kb, kx2 = jax.random.split(key, 4)

    def ref_norm2d(x, w, b, eps=1e-6):
        # Pure-JAX reference mirroring the PyTorch permute -> LayerNorm -> permute.
        xt = jnp.transpose(x, (0, 2, 3, 1)).astype(jnp.float32)
        mean = jnp.mean(xt, axis=-1, keepdims=True)
        var = jnp.mean((xt - mean) ** 2, axis=-1, keepdims=True)
        y = (xt - mean) / jnp.sqrt(var + eps) * w + b
        return jnp.transpose(y, (0, 3, 1, 2)).astype(x.dtype)

    B, C, H, W = 2, 32, 16, 16            # embed_dim = 32
    x = jax.random.normal(kx, (B, C, H, W), dtype=jnp.float32)

    module = Norm2d(embed_dim=C)
    # Non-trivial affine params so the scale/shift path is actually exercised.
    module.weight = 1.0 + 0.1 * jax.random.normal(kw, (C,), dtype=jnp.float32)
    module.bias = 0.1 * jax.random.normal(kb, (C,), dtype=jnp.float32)

    y = jax.block_until_ready(module(x))
    ref = ref_norm2d(x, module.weight, module.bias)
    assert y.shape == x.shape and y.dtype == x.dtype
    assert jnp.allclose(y, ref, atol=1e-4, rtol=1e-4), float(jnp.max(jnp.abs(y - ref)))

    # Exercise the non-128-multiple H*W path (spatial padding branch, B=1).
    x_odd = jax.random.normal(kx2, (1, C, 10, 10), dtype=jnp.float32)
    y_odd = jax.block_until_ready(module(x_odd))
    ref_odd = ref_norm2d(x_odd, module.weight, module.bias)
    assert y_odd.shape == x_odd.shape
    assert jnp.allclose(y_odd, ref_odd, atol=1e-4, rtol=1e-4), float(
        jnp.max(jnp.abs(y_odd - ref_odd)))

    print("KERNEL_OK")
</pallas_src>

<mosaic_0001>
module attributes {stable_mosaic.version = 11 : i64} {
  func.func @_norm2d_kernel(%arg0: i32, %arg1: i32, %arg2: memref<1x32x256xf32, #tpu.memory_space<vmem>>, %arg3: memref<1x32x1xf32, #tpu.memory_space<vmem>>, %arg4: memref<1x32x1xf32, #tpu.memory_space<vmem>>, %arg5: memref<1x32x256xf32, #tpu.memory_space<vmem>>) attributes {dimension_semantics = [#tpu.dimension_semantics<parallel>, #tpu.dimension_semantics<parallel>], iteration_bounds = array<i64: 2, 1>, scalar_prefetch = 0 : i64, scratch_operands = 0 : i64, tpu.core_type = #tpu.core_type<tc>, window_params = [{transform_indices = @transform_0, window_bounds = array<i64: 1, 32, 256>}, {pipeline_mode = #tpu.pipeline_mode<synchronous>, transform_indices = @transform_1, window_bounds = array<i64: 1, 32, 1>}, {pipeline_mode = #tpu.pipeline_mode<synchronous>, transform_indices = @transform_2, window_bounds = array<i64: 1, 32, 1>}, {transform_indices = @transform_3, window_bounds = array<i64: 1, 32, 256>}]} {
    %c0 = arith.constant 0 : index
    %c0_0 = arith.constant 0 : index
    %c0_1 = arith.constant 0 : index
    %0 = vector.load %arg2[%c0, %c0_0, %c0_1] : memref<1x32x256xf32, #tpu.memory_space<vmem>>, vector<1x32x256xf32>
    %cst = arith.constant dense<0.000000e+00> : vector<1x256xf32>
    %1 = vector.multi_reduction <add>, %0, %cst [1] : vector<1x32x256xf32> to vector<1x256xf32>
    %2 = vector.shape_cast %1 : vector<1x256xf32> to vector<1x1x256xf32>
    %3 = arith.mulf %0, %0 : vector<1x32x256xf32>
    %cst_2 = arith.constant dense<0.000000e+00> : vector<1x256xf32>
    %4 = vector.multi_reduction <add>, %3, %cst_2 [1] : vector<1x32x256xf32> to vector<1x256xf32>
    %5 = vector.shape_cast %4 : vector<1x256xf32> to vector<1x1x256xf32>
    %cst_3 = arith.constant 3.125000e-02 : f32
    %6 = vector.broadcast %cst_3 : f32 to vector<1x1x256xf32>
    %7 = arith.mulf %2, %6 : vector<1x1x256xf32>
    %cst_4 = arith.constant 3.125000e-02 : f32
    %8 = vector.broadcast %cst_4 : f32 to vector<1x1x256xf32>
    %9 = arith.mulf %5, %8 : vector<1x1x256xf32>
    %10 = arith.mulf %7, %7 : vector<1x1x256xf32>
    %11 = arith.subf %9, %10 : vector<1x1x256xf32>
    %cst_5 = arith.constant 9.99999997E-7 : f32
    %12 = vector.broadcast %cst_5 : f32 to vector<1x1x256xf32>
    %13 = arith.addf %11, %12 : vector<1x1x256xf32>
    %14 = math.rsqrt %13 : vector<1x1x256xf32>
    %c0_6 = arith.constant 0 : index
    %c0_7 = arith.constant 0 : index
    %c0_8 = arith.constant 0 : index
    %15 = vector.load %arg3[%c0_6, %c0_7, %c0_8] : memref<1x32x1xf32, #tpu.memory_space<vmem>>, vector<1x32x1xf32>
    %16 = vector.broadcast %15 : vector<1x32x1xf32> to vector<1x32x256xf32>
    %17 = vector.broadcast %14 : vector<1x1x256xf32> to vector<1x32x256xf32>
    %18 = arith.mulf %16, %17 : vector<1x32x256xf32>
    %c0_9 = arith.constant 0 : index
    %c0_10 = arith.constant 0 : index
    %c0_11 = arith.constant 0 : index
    %19 = vector.load %arg4[%c0_9, %c0_10, %c0_11] : memref<1x32x1xf32, #tpu.memory_space<vmem>>, vector<1x32x1xf32>
    %20 = vector.broadcast %7 : vector<1x1x256xf32> to vector<1x32x256xf32>
    %21 = arith.mulf %20, %18 : vector<1x32x256xf32>
    %22 = vector.broadcast %19 : vector<1x32x1xf32> to vector<1x32x256xf32>
    %23 = arith.subf %22, %21 : vector<1x32x256xf32>
    %24 = arith.mulf %0, %18 : vector<1x32x256xf32>
    %25 = arith.addf %24, %23 : vector<1x32x256xf32>
    %c0_12 = arith.constant 0 : index
    %c0_13 = arith.constant 0 : index
    %c0_14 = arith.constant 0 : index
    %26 = vector.load %arg5[%c0_12, %c0_13, %c0_14] : memref<1x32x256xf32, #tpu.memory_space<vmem>>, vector<1x32x256xf32>
    tpu.vector_store %arg5[%c0_12, %c0_13, %c0_14], %25 {strides = array<i32>} : memref<1x32x256xf32, #tpu.memory_space<vmem>>, vector<1x32x256xf32>,
    return
  }
  func.func @transform_0(%arg0: i32, %arg1: i32) -> (i32, i32, i32) {
    %c0_i32 = arith.constant 0 : i32
    %c0_i32_0 = arith.constant 0 : i32
    return %arg0, %c0_i32, %arg1 : i32, i32, i32
  }
  func.func @transform_1(%arg0: i32, %arg1: i32) -> (i32, i32, i32) {
    %c0_i32 = arith.constant 0 : i32
    %c0_i32_0 = arith.constant 0 : i32
    %c0_i32_1 = arith.constant 0 : i32
    %c0_i32_2 = arith.constant 0 : i32
    return %c0_i32, %c0_i32_0, %c0_i32_1 : i32, i32, i32
  }
  func.func @transform_2(%arg0: i32, %arg1: i32) -> (i32, i32, i32) {
    %c0_i32 = arith.constant 0 : i32
    %c0_i32_0 = arith.constant 0 : i32
    %c0_i32_1 = arith.constant 0 : i32
    %c0_i32_2 = arith.constant 0 : i32
    return %c0_i32, %c0_i32_0, %c0_i32_1 : i32, i32, i32
  }
  func.func @transform_3(%arg0: i32, %arg1: i32) -> (i32, i32, i32) {
    %c0_i32 = arith.constant 0 : i32
    %c0_i32_0 = arith.constant 0 : i32
    return %arg0, %c0_i32, %arg1 : i32, i32, i32
  }
}

</mosaic_0001>

<llo_original>
// kernel: tpu_custom_call.1
$region0: #{tpu_custom_call.1}
  #allocation0 [shape = 'u32[]', space=smem, size = 0x4, offset = 0x4, fixed_abs, tag = 'smem constant byte address 0x4 - core index']
  #allocation1 [shape = 'u32[72,128]{1,0:T(1,128)}', space=vmem, size = 0x9000, scoped, tag = 'internal scratch']
  %s0 = inlined_call_operand.hbm [shape: f32[2,32,256], index: 0, kind: input, shape index: {}]
  %s1 = inlined_call_operand.vmem [shape: f32[1,32,1], index: 1, kind: input, shape index: {}]
  %s2 = inlined_call_operand.vmem [shape: f32[1,32,1], index: 2, kind: input, shape index: {}]
  %s3 = inlined_call_operand.hbm [shape: f32[2,32,256], index: 3, kind: output, shape index: {}]
  %s4 = sld [smem:[#allocation0]]
  $region49: #{tpu_custom_call.1} parent=0
    _
  %s6 = ssub.s32 1, %s4
  %s7 = scalar_select 0, %s6, %s4
  $region1: #{tpu_custom_call.1} parent=0
    #allocation2 [shape = 'u8[65536]{0}', space=vmem, size = 0x10000, scoped, tag = 'input window, operand 0']
    #allocation3 [shape = 's32[2]{0}', space=sflag, size = 0x8, scoped, tag = 'scoped memory for tpu_custom_call.1']
    #allocation4 [shape = 's32[2]{0}', space=sflag, size = 0x8, scoped, tag = 'scoped memory for tpu_custom_call.1']
    #allocation5 [shape = 'u8[65536]{0}', space=vmem, size = 0x10000, scoped, tag = 'output window, operand 0']
    %8 = vsyncpa [#allocation3], 0
    %s9 = scalar_lea.sflag [#allocation3], 1
    %10 = vsyncpa %s9, 0
    %11 = vsyncpa [#allocation4], 0
    %s12 = scalar_lea.sflag [#allocation4], 1
    %13 = vsyncpa %s12, 0
    loop: start=0, step=1, limit=4
    $region2: #{tpu_custom_call.1} parent=1 // loop_pre_header
      _
    $region3: #{tpu_custom_call.1} parent=1 // loop_header
      %s15 = sphi 0, %s19
      %p16 = scmp.ge.s32.totalorder %s15, 4
      %s22 = sphi 0, %s34
      %s23 = sphi 0, %s30
      %s24 = sphi 0, %s22
      %s25 = sphi 0, %s23
      %s26 = sphi 0, %s24
      %s27 = sphi 0, %s25
      %s39 = sphi 0, %s41
      %s42 = sphi 0, %s39
      %s43 = sphi 0, %s42
      %s59 = sphi 0, %s43
      %s63 = sphi 0, %s63
      %s65 = sphi 0, %s63
      %s66 = sphi 0, %s65
      %s80 = sphi 0, %s66
      %s84 = sphi 0, %s84
      %s86 = sphi 0, %s84
      %s87 = sphi 0, %s86
      %s101 = sphi 0, %s87
      %s109 = sphi 0, %s111
      %s112 = sphi 0, %s109
      %s113 = sphi 0, %s112
      %s129 = sphi 0, %s113
    $region4: #{tpu_custom_call.1} parent=1 // loop_header_branch
      %18 = sbr.rel (%p16) target = $region8
    $region5: #{tpu_custom_call.1} parent=1 // loop_body
      %s20 = ssub.s32 %s15, 1
      %s21 = ssub.s32 %s15, 2
      %s28 = sadd.s32 1, %s23
      %p29 = scmp.ge.s32.totalorder %s28, 1
      %s30 = scalar_select %p29, 0, %s28
      %s31 = sadd.s32 1, %s22
      %s32 = scalar_select %p29, %s31, %s22
      %p33 = scmp.ge.s32.totalorder %s32, 2
      %s34 = scalar_select %p33, 0, %s32
      %s35 = ssub.s32 %s22, %s34
      %s36 = ssub.s32 %s23, %s30
      %s37 = sor.u32 %s35, %s36
      %p38 = scmp.eq.s32.totalorder %s37, 0
      %s40 = sadd.s32 %s39, 1
      %s41 = scalar_select %p38, %s39, %s40
      %p44 = pneg %p38
      %p45 = scmp.eq.s32.totalorder %s15, 1
      %p46 = por %p44, %p45
      %p47 = scmp.ne.s32.totalorder %s39, %s42
      %p48 = scmp.eq.s32.totalorder %s15, 0
      %p49 = por %p47, %p48
      %p50 = scmp.ne.s32.totalorder %s39, %s42
      %p51 = scmp.eq.s32.totalorder %s20, 1
      %p52 = por %p50, %p51
      %p53 = scmp.ne.s32.totalorder %s42, %s43
      %p54 = scmp.eq.s32.totalorder %s20, 0
      %p55 = por %p53, %p54
      %p56 = scmp.ne.s32.totalorder %s42, %s43
      %p57 = scmp.eq.s32.totalorder %s21, 1
      %p58 = por %p56, %p57
      %p60 = scmp.ne.s32.totalorder %s43, %s59
      %p61 = scmp.eq.s32.totalorder %s21, 0
      %p62 = por %p60, %p61
      %s64 = sadd.s32 %s63, 1
      %p67 = scmp.eq.s32.totalorder %s15, 1
      %p68 = scmp.ne.s32.totalorder %s63, %s65
      %p69 = scmp.eq.s32.totalorder %s15, 0
      %p70 = por %p68, %p69
      %p71 = scmp.ne.s32.totalorder %s63, %s65
      %p72 = scmp.eq.s32.totalorder %s20, 1
      %p73 = por %p71, %p72
      %p74 = scmp.ne.s32.totalorder %s65, %s66
      %p75 = scmp.eq.s32.totalorder %s20, 0
      %p76 = por %p74, %p75
      %p77 = scmp.ne.s32.totalorder %s65, %s66
      %p78 = scmp.eq.s32.totalorder %s21, 1
      %p79 = por %p77, %p78
      %p81 = scmp.ne.s32.totalorder %s66, %s80
      %p82 = scmp.eq.s32.totalorder %s21, 0
      %p83 = por %p81, %p82
      %s85 = sadd.s32 %s84, 1
      %p88 = scmp.eq.s32.totalorder %s15, 1
      %p89 = scmp.ne.s32.totalorder %s84, %s86
      %p90 = scmp.eq.s32.totalorder %s15, 0
      %p91 = por %p89, %p90
      %p92 = scmp.ne.s32.totalorder %s84, %s86
      %p93 = scmp.eq.s32.totalorder %s20, 1
      %p94 = por %p92, %p93
      %p95 = scmp.ne.s32.totalorder %s86, %s87
      %p96 = scmp.eq.s32.totalorder %s20, 0
      %p97 = por %p95, %p96
      %p98 = scmp.ne.s32.totalorder %s86, %s87
      %p99 = scmp.eq.s32.totalorder %s21, 1
      %p100 = por %p98, %p99
      %p102 = scmp.ne.s32.totalorder %s87, %s101
      %p103 = scmp.eq.s32.totalorder %s21, 0
      %p104 = por %p102, %p103
      %s105 = ssub.s32 %s22, %s34
      %s106 = ssub.s32 %s23, %s30
      %s107 = sor.u32 %s105, %s106
      %p108 = scmp.eq.s32.totalorder %s107, 0
      %s110 = sadd.s32 %s109, 1
      %s111 = scalar_select %p108, %s109, %s110
      %p114 = pneg %p108
      %p115 = scmp.eq.s32.totalorder %s15, 1
      %p116 = por %p114, %p115
      %p117 = scmp.ne.s32.totalorder %s109, %s112
      %p118 = scmp.eq.s32.totalorder %s15, 0
      %p119 = por %p117, %p118
      %p120 = scmp.ne.s32.totalorder %s109, %s112
      %p121 = scmp.eq.s32.totalorder %s20, 1
      %p122 = por %p120, %p121
      %p123 = scmp.ne.s32.totalorder %s112, %s113
      %p124 = scmp.eq.s32.totalorder %s20, 0
      %p125 = por %p123, %p124
      %p126 = scmp.ne.s32.totalorder %s112, %s113
      %p127 = scmp.eq.s32.totalorder %s21, 1
      %p128 = por %p126, %p127
      %p130 = scmp.ne.s32.totalorder %s113, %s129
      %p131 = scmp.eq.s32.totalorder %s21, 0
      %p132 = por %p130, %p131
      %p133 = scmp.le.s32.totalorder 1, %s15
      %p134 = scmp.lt.s32.totalorder %s15, 3
      %p135 = pnand %p133, %p134
      %p136 = pneg %p135
      // Predicated region
      $region9: #{tpu_custom_call.1} parent=5 // pred_check
        _
      $region10: #{tpu_custom_call.1} parent=5 // pred_check_branch
        %138 = sbr.rel (%p135) target = $region12
      $region11: #{tpu_custom_call.1} parent=5 // pred_region
        %s139 = ssub.s32 %s15, 1
        // Predicated region
        $region13: #{tpu_custom_call.1} parent=11 // pred_check
          %p140 = pneg %p76
        $region14: #{tpu_custom_call.1} parent=11 // pred_check_branch
          %142 = sbr.rel (%p140) target = $region16
        $region15: #{tpu_custom_call.1} parent=11 // pred_region
          _
        $region16: #{tpu_custom_call.1} parent=11 // pred_fallthru
          _
        // Predicated region
        $region17: #{tpu_custom_call.1} parent=11 // pred_check
          %p143 = pneg %p97
        $region18: #{tpu_custom_call.1} parent=11 // pred_check_branch
          %145 = sbr.rel (%p143) target = $region20
        $region19: #{tpu_custom_call.1} parent=11 // pred_region
          _
        $region20: #{tpu_custom_call.1} parent=11 // pred_fallthru
          _
      $region12: #{tpu_custom_call.1} parent=5 // pred_fallthru
        _
      %p146 = scmp.lt.s32.totalorder %s15, 2
      // Predicated region
      $region21: #{tpu_custom_call.1} parent=5 // pred_check
        %p147 = pneg %p146
      $region22: #{tpu_custom_call.1} parent=5 // pred_check_branch
        %149 = sbr.rel (%p147) target = $region24
      $region23: #{tpu_custom_call.1} parent=5 // pred_region
        // Predicated region
        $region25: #{tpu_custom_call.1} parent=23 // pred_check
          %p150 = pneg %p49
        $region26: #{tpu_custom_call.1} parent=23 // pred_check_branch
          %152 = sbr.rel (%p150) target = $region28
        $region27: #{tpu_custom_call.1} parent=23 // pred_region
          %s153 = sand.u32 %s39, 1
          %s154 = scalar_lea.sflag [#allocation3], %s153
          %s155 = sand.u32 %s39, 1
          %s156 = smul.addr %s155, 64
          %s157 = scalar_lea.vmem [#allocation2], %s156
          %s158 = smul.u32 2, %s23
          %160 = vsyncadd %s154, 0
          %s161 = smul.addr %s22, 8
          %s162 = sadd.s32 %s158, %s161
          %s163 = smul.addr %s162, 8
          %s164 = scalar_lea.hbm %s0, %s163
          %s165 = sshll.u32 %s164, 4
          %s166 = int_to_ptr.hbm [resolvable:$true] %s165
          %s167 = sshll.u32 %s157, 4
          %s168 = int_to_ptr.vmem [resolvable:$true] %s167
          %173 = dma.hbm_to_vmem [thread:$0]  %s166, 1024, %s168, %s154, 256, 256, 16
        $region28: #{tpu_custom_call.1} parent=23 // pred_fallthru
          _
      $region24: #{tpu_custom_call.1} parent=5 // pred_fallthru
        _
      %p174 = scmp.le.s32.totalorder 1, %s15
      %p175 = scmp.lt.s32.totalorder %s15, 3
      %p176 = pnand %p174, %p175
      %p177 = pneg %p176
      // Predicated region
      $region29: #{tpu_custom_call.1} parent=5 // pred_check
        _
      $region30: #{tpu_custom_call.1} parent=5 // pred_check_branch
        %179 = sbr.rel (%p176) target = $region32
      $region31: #{tpu_custom_call.1} parent=5 // pred_region
        %s180 = ssub.s32 %s15, 1
        %s181 = sand.u32 %s42, 1
        %s182 = scalar_lea.sflag [#allocation3], %s181
        %s183 = sand.u32 %s42, 1
        %s184 = smul.addr %s183, 64
        %s185 = scalar_lea.vmem [#allocation2], %s184
        // Predicated region
        $region33: #{tpu_custom_call.1} parent=31 // pred_check
          %p186 = pneg %p55
        $region34: #{tpu_custom_call.1} parent=31 // pred_check_branch
          %188 = sbr.rel (%p186) target = $region36
        $region35: #{tpu_custom_call.1} parent=31 // pred_region
          %190 = dma.done %s182, 1024
        $region36: #{tpu_custom_call.1} parent=31 // pred_fallthru
          _
        %s191 = sand.u32 %s42, 1
        %s192 = scalar_lea.sflag [#allocation3], %s191
        %s193 = sand.u32 %s42, 1
        %s194 = smul.addr %s193, 64
        %s195 = scalar_lea.vmem [#allocation2], %s194
        %p196 = pneg %p55
        %p197 = pneg %p52
        %p198 = pneg %p76
        %p199 = pneg %p73
        %p200 = pneg %p97
        %p201 = pneg %p94
        %p202 = pneg %p125
        %p203 = pneg %p122
        %s204 = sand.u32 %s112, 1
        %s205 = scalar_lea.sflag [#allocation4], %s204
        %s206 = sand.u32 %s112, 1
        %s207 = smul.addr %s206, 64
        %s208 = scalar_lea.vmem [#allocation5], %s207
        %s209 = smul.u32 2, %s25
        %s210 = smul.u32 2, %s25
        %v211 = vld [vmem:[%s185] sm:$0xff]
        %v212 = vld [vmem:[%s185 + $0x8] sm:$0xff]
        %v213 = vld [vmem:[%s185 + $0x10] sm:$0xff]
        %v214 = vld [vmem:[%s185 + $0x18] sm:$0xff]
        %v215 = vld [vmem:[%s185 + $0x20] sm:$0xff]
        %v216 = vld [vmem:[%s185 + $0x28] sm:$0xff]
        %v217 = vld [vmem:[%s185 + $0x30] sm:$0xff]
        %v218 = vld [vmem:[%s185 + $0x38] sm:$0xff]
        %v219 = vadd.f32 %v211, %v213
        %v220 = vadd.f32 %v219, %v215
        %v221 = vadd.f32 %v220, %v217
        %v222 = vrot.slane %v221, 4
        %v223 = vadd.f32 %v221, %v222
        %v224 = vrot.slane %v223, 2
        %v225 = vadd.f32 %v223, %v224
        %v226 = vrot.slane %v225, 1
        %v227 = vadd.f32 %v225, %v226
        %v228 = vadd.f32 %v212, %v214
        %v229 = vadd.f32 %v228, %v216
        %v230 = vadd.f32 %v229, %v218
        %v231 = vrot.slane %v230, 4
        %v232 = vadd.f32 %v230, %v231
        %v233 = vrot.slane %v232, 2
        %v234 = vadd.f32 %v232, %v233
        %v235 = vrot.slane %v234, 1
        %v236 = vadd.f32 %v234, %v235
        %v237 = vmul.f32 %v211, %v211
        %v238 = vmul.f32 %v212, %v212
        %v239 = vmul.f32 %v213, %v213
        %v240 = vmul.f32 %v214, %v214
        %v241 = vmul.f32 %v215, %v215
        %v242 = vmul.f32 %v216, %v216
        %v243 = vmul.f32 %v217, %v217
        %v244 = vmul.f32 %v218, %v218
        %v245 = vadd.f32 %v237, %v239
        %v246 = vadd.f32 %v245, %v241
        %v247 = vadd.f32 %v246, %v243
        %v248 = vrot.slane %v247, 4
        %v249 = vadd.f32 %v247, %v248
        %v250 = vrot.slane %v249, 2
        %v251 = vadd.f32 %v249, %v250
        %v252 = vrot.slane %v251, 1
        %v253 = vadd.f32 %v251, %v252
        %v254 = vadd.f32 %v238, %v240
        %v255 = vadd.f32 %v254, %v242
        %v256 = vadd.f32 %v255, %v244
        %v257 = vrot.slane %v256, 4
        %v258 = vadd.f32 %v256, %v257
        %v259 = vrot.slane %v258, 2
        %v260 = vadd.f32 %v258, %v259
        %v261 = vrot.slane %v260, 1
        %v262 = vadd.f32 %v260, %v261
        %v263 = vmul.f32 %v227, 0.03125
        %v264 = vmul.f32 %v236, 0.03125
        %v265 = vmul.f32 %v253, 0.03125
        %v266 = vmul.f32 %v262, 0.03125
        %v267 = vmul.f32 %v263, %v263
        %v268 = vmul.f32 %v264, %v264
        %v269 = vsub.f32 %v265, %v267
        %v270 = vsub.f32 %v266, %v268
        %v271 = vadd.f32 %v269, 1e-06
        %v272 = vadd.f32 %v270, 1e-06
        %v273 = vrsqrt.pop %v271
        %v274 = vmul.f32 %v273, %v271
        %v275 = vmul.f32 %v274, %v273
        %v276 = vmul.f32 0.5, %v275
        %v277 = vsub.f32 1.5, %v276
        %v278 = vmul.f32 %v273, %v277
        %vm279 = vweird.f32 %v271
        %vm280 = vweird.f32 %v273
        %vm281 = vmor %vm279, %vm280
        %v282 = vsel %vm281, %v273, %v278
        %v283 = vrsqrt.pop %v272
        %v284 = vmul.f32 %v283, %v272
        %v285 = vmul.f32 %v284, %v283
        %v286 = vmul.f32 0.5, %v285
        %v287 = vsub.f32 1.5, %v286
        %v288 = vmul.f32 %v283, %v287
        %vm289 = vweird.f32 %v272
        %vm290 = vweird.f32 %v283
        %vm291 = vmor %vm289, %vm290
        %v292 = vsel %vm291, %v283, %v288
        %v293 = vld [vmem:[%s1] sm:$0xff]
        %v294 = vld [vmem:[%s1 + $0x8] sm:$0xff]
        %v295 = vld [vmem:[%s1 + $0x10] sm:$0xff]
        %v296 = vld [vmem:[%s1 + $0x18] sm:$0xff]
        %298 = vset.pattern.permute.xlu0 0
        %299 = vperm.xlu0 %298, %v293
        %v300 = vpop.permute.xlu0 %299
        %303 = vset.pattern.permute.xlu0 0
        %304 = vperm.xlu0 %303, %v294
        %v305 = vpop.permute.xlu0 %304
        %308 = vset.pattern.permute.xlu0 0
        %309 = vperm.xlu0 %308, %v295
        %v310 = vpop.permute.xlu0 %309
        %313 = vset.pattern.permute.xlu0 0
        %314 = vperm.xlu0 %313, %v296
        %v315 = vpop.permute.xlu0 %314
        %v317 = vmul.f32 %v300, %v282
        %v318 = vmul.f32 %v300, %v292
        %v319 = vmul.f32 %v305, %v282
        %v320 = vmul.f32 %v305, %v292
        %v321 = vmul.f32 %v310, %v282
        %v322 = vmul.f32 %v310, %v292
        %v323 = vmul.f32 %v315, %v282
        %v324 = vmul.f32 %v315, %v292
        %v325 = vld [vmem:[%s2] sm:$0xff]
        %v326 = vld [vmem:[%s2 + $0x8] sm:$0xff]
        %v327 = vld [vmem:[%s2 + $0x10] sm:$0xff]
        %v328 = vld [vmem:[%s2 + $0x18] sm:$0xff]
        %v329 = vmul.f32 %v263, %v317
        %v330 = vmul.f32 %v264, %v318
        %v331 = vmul.f32 %v263, %v319
        %v332 = vmul.f32 %v264, %v320
        %v333 = vmul.f32 %v263, %v321
        %v334 = vmul.f32 %v264, %v322
        %v335 = vmul.f32 %v263, %v323
        %v336 = vmul.f32 %v264, %v324
        %338 = vset.pattern.permute.xlu0 0
        %339 = vperm.xlu0 %338, %v325
        %v340 = vpop.permute.xlu0 %339
        %343 = vset.pattern.permute.xlu0 0
        %344 = vperm.xlu0 %343, %v326
        %v345 = vpop.permute.xlu0 %344
        %348 = vset.pattern.permute.xlu0 0
        %349 = vperm.xlu0 %348, %v327
        %v350 = vpop.permute.xlu0 %349
        %353 = vset.pattern.permute.xlu0 0
        %354 = vperm.xlu0 %353, %v328
        %v355 = vpop.permute.xlu0 %354
        %v357 = vsub.f32 %v340, %v329
        %v358 = vsub.f32 %v340, %v330
        %v359 = vsub.f32 %v345, %v331
        %v360 = vsub.f32 %v345, %v332
        %v361 = vsub.f32 %v350, %v333
        %v362 = vsub.f32 %v350, %v334
        %v363 = vsub.f32 %v355, %v335
        %v364 = vsub.f32 %v355, %v336
        %v365 = vmul.f32 %v211, %v317
        %v366 = vmul.f32 %v212, %v318
        %v367 = vmul.f32 %v213, %v319
        %v368 = vmul.f32 %v214, %v320
        %v369 = vmul.f32 %v215, %v321
        %v370 = vmul.f32 %v216, %v322
        %v371 = vmul.f32 %v217, %v323
        %v372 = vmul.f32 %v218, %v324
        %v373 = vadd.f32 %v365, %v357
        %v374 = vadd.f32 %v366, %v358
        %v375 = vadd.f32 %v367, %v359
        %v376 = vadd.f32 %v368, %v360
        %v377 = vadd.f32 %v369, %v361
        %v378 = vadd.f32 %v370, %v362
        %v379 = vadd.f32 %v371, %v363
        %v380 = vadd.f32 %v372, %v364
        %381 = vst [vmem:[%s208] sm:$0xff] %v373
        %382 = vst [vmem:[%s208 + $0x8] sm:$0xff] %v374
        %383 = vst [vmem:[%s208 + $0x10] sm:$0xff] %v375
        %384 = vst [vmem:[%s208 + $0x18] sm:$0xff] %v376
        %385 = vst [vmem:[%s208 + $0x20] sm:$0xff] %v377
        %386 = vst [vmem:[%s208 + $0x28] sm:$0xff] %v378
        %387 = vst [vmem:[%s208 + $0x30] sm:$0xff] %v379
        %388 = vst [vmem:[%s208 + $0x38] sm:$0xff] %v380
        %s389 = sand.u32 %s112, 1
        %s390 = scalar_lea.sflag [#allocation4], %s389
        %s391 = sand.u32 %s112, 1
        %s392 = smul.addr %s391, 64
        %s393 = scalar_lea.vmem [#allocation5], %s392
        // Predicated region
        $region37: #{tpu_custom_call.1} parent=31 // pred_check
          %p394 = pneg %p122
        $region38: #{tpu_custom_call.1} parent=31 // pred_check_branch
          %396 = sbr.rel (%p394) target = $region40
        $region39: #{tpu_custom_call.1} parent=31 // pred_region
          %s397 = smul.u32 2, %s25
          %399 = vsyncadd %s390, 0
          %s400 = smul.addr %s24, 8
          %s401 = sadd.s32 %s397, %s400
          %s402 = smul.addr %s401, 8
          %s403 = scalar_lea.hbm %s3, %s402
          %s404 = sshll.u32 %s393, 4
          %s405 = int_to_ptr.vmem [resolvable:$true] %s404
          %s406 = sshll.u32 %s403, 4
          %s407 = int_to_ptr.hbm [resolvable:$true] %s406
          %412 = dma.vmem_to_hbm [thread:$0]  %s405, 1024, %s407, %s390, 256, 256, 16
        $region40: #{tpu_custom_call.1} parent=31 // pred_fallthru
          _
      $region32: #{tpu_custom_call.1} parent=5 // pred_fallthru
        _
      %p413 = scmp.le.s32.totalorder 2, %s15
      // Predicated region
      $region41: #{tpu_custom_call.1} parent=5 // pred_check
        %p414 = pneg %p413
      $region42: #{tpu_custom_call.1} parent=5 // pred_check_branch
        %416 = sbr.rel (%p414) target = $region44
      $region43: #{tpu_custom_call.1} parent=5 // pred_region
        %s417 = ssub.s32 %s15, 2
        // Predicated region
        $region45: #{tpu_custom_call.1} parent=43 // pred_check
          %p418 = pneg %p128
        $region46: #{tpu_custom_call.1} parent=43 // pred_check_branch
          %420 = sbr.rel (%p418) target = $region48
        $region47: #{tpu_custom_call.1} parent=43 // pred_region
          %s421 = sand.u32 %s113, 1
          %s422 = scalar_lea.sflag [#allocation4], %s421
          %s423 = sand.u32 %s113, 1
          %s424 = smul.addr %s423, 64
          %s425 = scalar_lea.vmem [#allocation5], %s424
          %427 = dma.done %s422, 1024
        $region48: #{tpu_custom_call.1} parent=43 // pred_fallthru
          _
      $region44: #{tpu_custom_call.1} parent=5 // pred_fallthru
        _
    $region6: #{tpu_custom_call.1} parent=1 // loop_footer
      %s19 = sadd.s32 1, %s15
    $region7: #{tpu_custom_call.1} parent=1 // loop_footer_branch
      %14 = sbr.rel target = $region3
    $region8: #{tpu_custom_call.1} parent=1 // loop_exit
      _
    %428 = vsyncpa [#allocation3], 1
    %s429 = scalar_lea.sflag [#allocation3], 1
    %430 = vsyncpa %s429, 1
    %431 = vsyncpa [#allocation4], 1
    %s432 = scalar_lea.sflag [#allocation4], 1
    %433 = vsyncpa %s432, 1

</llo_original>
